<compile_context>
chip_gen: v6e
topology: v6e:2x2x1
jax: 0.10.0
libtpu: 0.0.40
codegen_flags: <defaults>
</compile_context>

<pallas_src>
import functools

import jax
import jax.numpy as jnp
import numpy as np
from jax import lax
from jax.experimental import pallas as pl
from jax.experimental.pallas import tpu as pltpu


def _row_sums_kernel(*refs, spb, n_s_total, rem, has_mask, padded, overhang):
    """Accumulate masked per-row sums of the three logprob streams (and the
    token count when a mask is present) over the S blocks owned by this
    parallel chunk; write one lane-dense (1, B, 128) partial tile."""
    if has_mask:
        (pi_old_ref, pi_ref, refl_ref, mask_ref, out_ref,
         acc_old, acc_pi, acc_rl, acc_cnt) = refs
    else:
        (pi_old_ref, pi_ref, refl_ref, out_ref,
         acc_old, acc_pi, acc_rl) = refs
        mask_ref = acc_cnt = None

    p = pl.program_id(0)
    k = pl.program_id(1)

    @pl.when(k == 0)
    def _init():
        acc_old[...] = jnp.zeros_like(acc_old)
        acc_pi[...] = jnp.zeros_like(acc_pi)
        acc_rl[...] = jnp.zeros_like(acc_rl)
        if has_mask:
            acc_cnt[...] = jnp.zeros_like(acc_cnt)

    def accumulate(clamp):
        # Inputs stream in their native dtype; upcast to f32 in-kernel.
        x_old = pi_old_ref[...].astype(jnp.float32)
        x_pi = pi_ref[...].astype(jnp.float32)
        x_rl = refl_ref[...].astype(jnp.float32)
        if has_mask:
            m = mask_ref[...]
            if clamp:  # last S block: also drop out-of-range (padding) lanes
                col = lax.broadcasted_iota(jnp.int32, x_old.shape, 1)
                m = jnp.logical_and(m, col < rem)
            acc_old[...] += jnp.sum(jnp.where(m, x_old, 0.0), axis=-1,
                                    keepdims=True)
            acc_pi[...] += jnp.sum(jnp.where(m, x_pi, 0.0), axis=-1,
                                   keepdims=True)
            acc_rl[...] += jnp.sum(jnp.where(m, x_rl, 0.0), axis=-1,
                                   keepdims=True)
            acc_cnt[...] += jnp.sum(m.astype(jnp.float32), axis=-1,
                                    keepdims=True)
        elif clamp:
            col = lax.broadcasted_iota(jnp.int32, x_old.shape, 1)
            valid = col < rem
            acc_old[...] += jnp.sum(jnp.where(valid, x_old, 0.0), axis=-1,
                                    keepdims=True)
            acc_pi[...] += jnp.sum(jnp.where(valid, x_pi, 0.0), axis=-1,
                                   keepdims=True)
            acc_rl[...] += jnp.sum(jnp.where(valid, x_rl, 0.0), axis=-1,
                                   keepdims=True)
        else:
            # No mask, no boundary: plain lane reductions (fast path).
            acc_old[...] += jnp.sum(x_old, axis=-1, keepdims=True)
            acc_pi[...] += jnp.sum(x_pi, axis=-1, keepdims=True)
            acc_rl[...] += jnp.sum(x_rl, axis=-1, keepdims=True)

    g = p * spb + k  # global S-block index owned by this grid step
    if padded:
        # Only the globally-last S block needs the out-of-range column clamp.
        interior = g != (n_s_total - 1)
        if overhang:
            interior = jnp.logical_and(interior, g < n_s_total)

        @pl.when(interior)
        def _interior():
            accumulate(clamp=False)

        @pl.when(g == n_s_total - 1)
        def _boundary():
            accumulate(clamp=True)
    elif overhang:
        @pl.when(g < n_s_total)
        def _valid():
            accumulate(clamp=False)
    else:
        accumulate(clamp=False)

    @pl.when(k == pl.num_programs(1) - 1)
    def _finalize():
        nb = acc_old.shape[0]
        lane = lax.broadcasted_iota(jnp.int32, (nb, out_ref.shape[-1]), 1)
        res = jnp.where(lane == 0, acc_old[...], 0.0)
        res = jnp.where(lane == 1, acc_pi[...], res)
        res = jnp.where(lane == 2, acc_rl[...], res)
        if has_mask:
            res = jnp.where(lane == 3, acc_cnt[...], res)
        out_ref[...] = res[None]


def _tpu_params():
    """(VMEM capacity bytes per TensorCore, TensorCores per chip)."""
    vmem_cap = 128 * 1024 * 1024
    n_cores = 1
    try:
        info = pltpu.get_tpu_info()
        cap = getattr(info, "vmem_capacity_bytes", None)
        if cap:
            vmem_cap = int(cap)
        for attr in ("tensorcores_per_chip", "num_tensorcores", "num_cores"):
            v = getattr(info, attr, None)
            if v:
                n_cores = int(v)
                break
    except Exception:
        pass
    try:
        kind = jax.devices()[0].device_kind.lower()
        if "v7" in kind:          # v7x: 2 TensorCores, 64 MiB VMEM per core
            n_cores = max(n_cores, 2)
            vmem_cap = min(vmem_cap, 64 * 1024 * 1024)
    except Exception:
        pass
    return vmem_cap, n_cores


def grpo_completion_loss(pi_old_logprobs, pi_logprobs, ref_logprobs,
                         advantages, padding_masks=None, *,
                         epsilon=0.1, kl_coeff=0.1,
                         _tile_budget_bytes=None, _num_cores=None):
    """Returns (loss, policy_loss, kl_loss, ratios_mean, clipfrac) f32 scalars.

    `_tile_budget_bytes` / `_num_cores` are test-only overrides that force the
    tiled-S / two-parallel-chunk code paths at small shapes; leave them None
    in production.  Wrap this function in jax.jit in production so the tiny
    [B]-sized epilogue fuses into a single XLA op.
    """
    B, S = pi_old_logprobs.shape
    has_mask = padding_masks is not None

    vmem_cap, n_cores = _tpu_params()
    if _num_cores is not None:
        n_cores = int(_num_cores)
    vmem_limit = (48 * 1024 * 1024 if vmem_cap <= 64 * 1024 * 1024
                  else 64 * 1024 * 1024)
    budget = (vmem_limit // 2 if _tile_budget_bytes is None
              else int(_tile_budget_bytes))

    # Bytes per S column held in one pipeline buffer (3 f32 streams + bool).
    per_col = B * (3 * 4 + (1 if has_mask else 0))
    max_cols = max(128, budget // (2 * per_col))   # x2: double-buffered
    if max_cols >= S:
        tile_s = S                                 # whole [B, S] in one block
    else:
        tile_s = (max_cols // 128) * 128
    n_s_total = pl.cdiv(S, tile_s)
    padded = n_s_total * tile_s != S
    rem = S - (n_s_total - 1) * tile_s             # valid cols in last S block

    # If even the minimal tile exceeds the chosen limit (huge B), raise the
    # compiler limit toward physical capacity instead of failing.
    min_ws = 2 * 2 * per_col * min(tile_s, S)
    if min_ws > vmem_limit:
        vmem_limit = min(int(vmem_cap * 0.9), min_ws + (4 << 20))

    # Use the second TensorCore (v7x) by splitting the S blocks, never B.
    n_p = 2 if (n_cores >= 2 and n_s_total >= 2) else 1
    spb = pl.cdiv(n_s_total, n_p)                  # S blocks per parallel chunk
    overhang = n_p * spb != n_s_total

    def stream_idx(p, k):
        g = p * spb + k
        if overhang:
            g = jnp.minimum(g, n_s_total - 1)      # never DMA past the array
        return (0, g)

    in_specs = [pl.BlockSpec((B, tile_s), stream_idx) for _ in range(3)]
    args = [pi_old_logprobs, pi_logprobs, ref_logprobs]
    if has_mask:
        mask = padding_masks
        if mask.dtype != jnp.bool_:
            mask = mask.astype(jnp.bool_)
        in_specs.append(pl.BlockSpec((B, tile_s), stream_idx))
        args.append(mask)                          # streamed as bool, 1 B/elem

    # TODO(synk): accumulators could be merged into one lane-wide scratch, but
    # with VMEM-budget tiles the kernel usually runs 1-2 grid steps so the
    # narrow (B,1) VMEM stores are negligible.
    scratch = [pltpu.VMEM((B, 1), jnp.float32)
               for _ in range(4 if has_mask else 3)]

    kernel = functools.partial(
        _row_sums_kernel, spb=spb, n_s_total=n_s_total, rem=rem,
        has_mask=has_mask, padded=padded, overhang=overhang)

    partials = pl.pallas_call(
        kernel,
        out_shape=jax.ShapeDtypeStruct((n_p, B, 128), jnp.float32),
        grid=(n_p, spb),
        in_specs=in_specs,
        out_specs=pl.BlockSpec((1, B, 128), lambda p, k: (p, 0, 0)),
        scratch_shapes=scratch,
        compiler_params=pltpu.CompilerParams(
            dimension_semantics=("parallel", "arbitrary"),
            vmem_limit_bytes=vmem_limit),
    )(*args)

    # Combine per-chunk partial row sums, then the tiny [B]-sized epilogue.
    sums = jnp.sum(partials, axis=0)               # (B, 128)
    pi_old_s, pi_s, ref_s = sums[:, 0], sums[:, 1], sums[:, 2]
    if has_mask:
        cnt = sums[:, 3]
    else:
        cnt = jnp.full((B,), float(S), jnp.float32)

    adv = advantages.reshape(B).astype(jnp.float32)
    ratios = jnp.exp(pi_s - pi_old_s)
    clipped = jnp.clip(ratios, 1.0 - epsilon, 1.0 + epsilon)
    plc = adv * clipped
    plu = adv * ratios
    clipfrac = jnp.mean((plc < plu).astype(jnp.float32))
    policy_loss = jnp.mean(jnp.minimum(plc, plu))
    d = ref_s - pi_s
    kl = jnp.exp(d) - d - 1.0
    kl_loss = jnp.sum(kl * cnt) / jnp.sum(cnt)
    loss = -(policy_loss - kl_coeff * kl_loss)
    return loss, policy_loss, kl_loss, jnp.mean(ratios), clipfrac


def _reference(pi_old, pi, refl, adv, mask, epsilon, kl_coeff):
    """Pure-JAX reference mirroring the PyTorch forward."""
    if mask is None:
        mask = jnp.ones(pi_old.shape, jnp.float32)
    else:
        mask = mask.astype(jnp.float32)
    msum = lambda x: (x.astype(jnp.float32) * mask).sum(-1)
    pi_old_s, pi_s, ref_s = msum(pi_old), msum(pi), msum(refl)
    ratios = jnp.exp(pi_s - pi_old_s)
    clipped = jnp.clip(ratios, 1.0 - epsilon, 1.0 + epsilon)
    plc = adv * clipped
    plu = adv * ratios
    clipfrac = (plc < plu).astype(jnp.float32).mean()
    policy_loss = jnp.minimum(plc, plu).mean()
    d = ref_s - pi_s
    kl = jnp.exp(d) - d - 1.0
    kl_loss = (kl[:, None] * mask).sum() / mask.sum()
    loss = -(policy_loss - kl_coeff * kl_loss)
    return loss, policy_loss, kl_loss, ratios.mean(), clipfrac


if __name__ == "__main__":
    # GRPOCompletionLoss has no learnable weights; its "parameters" are the
    # scalar hyperparameters epsilon / kl_coeff from __init__ defaults.
    epsilon, kl_coeff = 0.1, 0.1
    root = jax.random.PRNGKey(0)

    def make_case(key, B, S, scale, with_mask):
        k1, k2, k3, k4, k5 = jax.random.split(key, 5)
        pi_old = -scale * jax.random.uniform(k1, (B, S), jnp.float32)
        pi = pi_old + 0.25 * scale * jax.random.normal(k2, (B, S), jnp.float32)
        refl = pi_old + 0.25 * scale * jax.random.normal(k3, (B, S), jnp.float32)
        adv = jax.random.normal(k4, (B,), jnp.float32)
        if with_mask:
            lengths = jax.random.randint(k5, (B,), minval=S // 2, maxval=S + 1)
            mask = jnp.arange(S)[None, :] < lengths[:, None]   # bool [B, S]
        else:
            mask = None
        return pi_old, pi, refl, adv, mask

    keys = jax.random.split(root, 3)
    cases = [
        # (inputs, planner overrides): primary case = batch 2 * 4 groups.
        (make_case(keys[0], 2 * 4, 16, 0.05, True), {}),         # 1 block + mask
        (make_case(keys[1], 16, 2048, 5e-4, False), {}),         # 1 block, no mask
        (make_case(keys[1], 16, 2048, 5e-4, False),              # tiled S, 2 chunks
         dict(_tile_budget_bytes=64 * 1024, _num_cores=2)),
        (make_case(keys[2], 10, 1100, 1e-3, True), {}),          # 1 block + mask
        (make_case(keys[2], 10, 1100, 1e-3, True),               # ragged + overhang
         dict(_tile_budget_bytes=48 * 1024, _num_cores=2)),
    ]

    for (pi_old, pi, refl, adv, mask), overrides in cases:
        outs = grpo_completion_loss(pi_old, pi, refl, adv, mask,
                                    epsilon=epsilon, kl_coeff=kl_coeff,
                                    **overrides)
        outs = jax.block_until_ready(outs)
        want = _reference(pi_old, pi, refl, adv, mask, epsilon, kl_coeff)
        for got, ref in zip(outs, want):
            np.testing.assert_allclose(np.asarray(got), np.asarray(ref),
                                       rtol=1e-4, atol=1e-6)

    print("KERNEL_OK")
</pallas_src>

<mosaic_0001>
module attributes {stable_mosaic.version = 11 : i64} {
  func.func @_row_sums_kernel(%arg0: i32, %arg1: i32, %arg2: memref<8x16xf32, #tpu.memory_space<vmem>>, %arg3: memref<8x16xf32, #tpu.memory_space<vmem>>, %arg4: memref<8x16xf32, #tpu.memory_space<vmem>>, %arg5: memref<8x16xi32, #tpu.memory_space<vmem>>, %arg6: memref<1x8x128xf32, #tpu.memory_space<vmem>>, %arg7: memref<8x1xf32, #tpu.memory_space<vmem>>, %arg8: memref<8x1xf32, #tpu.memory_space<vmem>>, %arg9: memref<8x1xf32, #tpu.memory_space<vmem>>, %arg10: memref<8x1xf32, #tpu.memory_space<vmem>>) attributes {dimension_semantics = [#tpu.dimension_semantics<parallel>, #tpu.dimension_semantics<arbitrary>], iteration_bounds = array<i64: 1, 1>, scalar_prefetch = 0 : i64, scratch_operands = 4 : i64, tpu.core_type = #tpu.core_type<tc>, window_params = [{transform_indices = @transform_0, window_bounds = array<i64: 8, 16>}, {transform_indices = @transform_1, window_bounds = array<i64: 8, 16>}, {transform_indices = @transform_2, window_bounds = array<i64: 8, 16>}, {transform_indices = @transform_3, window_bounds = array<i64: 8, 16>}, {transform_indices = @transform_4, window_bounds = array<i64: 1, 8, 128>}]} {
    %c0_i32 = arith.constant 0 : i32
    %0 = arith.cmpi eq, %arg1, %c0_i32 : i32
    %1 = arith.extui %0 : i1 to i32
    %c0_i32_0 = arith.constant 0 : i32
    %2 = arith.cmpi ne, %1, %c0_i32_0 : i32
    scf.if %2 {
      %cst_33 = arith.constant 0.000000e+00 : f32
      %39 = vector.broadcast %cst_33 : f32 to vector<8x1xf32>
      %c0_34 = arith.constant 0 : index
      %c0_35 = arith.constant 0 : index
      %40 = vector.load %arg7[%c0_34, %c0_35] : memref<8x1xf32, #tpu.memory_space<vmem>>, vector<8x1xf32>
      tpu.vector_store %arg7[%c0_34, %c0_35], %39 {strides = array<i32>} : memref<8x1xf32, #tpu.memory_space<vmem>>, vector<8x1xf32>,
      %cst_36 = arith.constant 0.000000e+00 : f32
      %41 = vector.broadcast %cst_36 : f32 to vector<8x1xf32>
      %c0_37 = arith.constant 0 : index
      %c0_38 = arith.constant 0 : index
      %42 = vector.load %arg8[%c0_37, %c0_38] : memref<8x1xf32, #tpu.memory_space<vmem>>, vector<8x1xf32>
      tpu.vector_store %arg8[%c0_37, %c0_38], %41 {strides = array<i32>} : memref<8x1xf32, #tpu.memory_space<vmem>>, vector<8x1xf32>,
      %cst_39 = arith.constant 0.000000e+00 : f32
      %43 = vector.broadcast %cst_39 : f32 to vector<8x1xf32>
      %c0_40 = arith.constant 0 : index
      %c0_41 = arith.constant 0 : index
      %44 = vector.load %arg9[%c0_40, %c0_41] : memref<8x1xf32, #tpu.memory_space<vmem>>, vector<8x1xf32>
      tpu.vector_store %arg9[%c0_40, %c0_41], %43 {strides = array<i32>} : memref<8x1xf32, #tpu.memory_space<vmem>>, vector<8x1xf32>,
      %cst_42 = arith.constant 0.000000e+00 : f32
      %45 = vector.broadcast %cst_42 : f32 to vector<8x1xf32>
      %c0_43 = arith.constant 0 : index
      %c0_44 = arith.constant 0 : index
      %46 = vector.load %arg10[%c0_43, %c0_44] : memref<8x1xf32, #tpu.memory_space<vmem>>, vector<8x1xf32>
      tpu.vector_store %arg10[%c0_43, %c0_44], %45 {strides = array<i32>} : memref<8x1xf32, #tpu.memory_space<vmem>>, vector<8x1xf32>,
    } else {
    }
    %c0 = arith.constant 0 : index
    %c0_1 = arith.constant 0 : index
    %3 = vector.load %arg2[%c0, %c0_1] : memref<8x16xf32, #tpu.memory_space<vmem>>, vector<8x16xf32>
    %c0_2 = arith.constant 0 : index
    %c0_3 = arith.constant 0 : index
    %4 = vector.load %arg3[%c0_2, %c0_3] : memref<8x16xf32, #tpu.memory_space<vmem>>, vector<8x16xf32>
    %c0_4 = arith.constant 0 : index
    %c0_5 = arith.constant 0 : index
    %5 = vector.load %arg4[%c0_4, %c0_5] : memref<8x16xf32, #tpu.memory_space<vmem>>, vector<8x16xf32>
    %c0_6 = arith.constant 0 : index
    %c0_7 = arith.constant 0 : index
    %6 = vector.load %arg5[%c0_6, %c0_7] : memref<8x16xi32, #tpu.memory_space<vmem>>, vector<8x16xi32>
    %cst = arith.constant dense<0> : vector<8x16xi32>
    %7 = arith.cmpi ne, %6, %cst : vector<8x16xi32>
    %c0_8 = arith.constant 0 : index
    %c0_9 = arith.constant 0 : index
    %8 = vector.load %arg7[%c0_8, %c0_9] : memref<8x1xf32, #tpu.memory_space<vmem>>, vector<8x1xf32>
    %cst_10 = arith.constant 0.000000e+00 : f32
    %9 = vector.broadcast %cst_10 : f32 to vector<8x16xf32>
    %10 = arith.select %7, %3, %9 : vector<8x16xi1>, vector<8x16xf32>
    %cst_11 = arith.constant dense<0.000000e+00> : vector<8xf32>
    %11 = vector.multi_reduction <add>, %10, %cst_11 [1] : vector<8x16xf32> to vector<8xf32>
    %12 = vector.shape_cast %11 : vector<8xf32> to vector<8x1xf32>
    %13 = arith.addf %8, %12 : vector<8x1xf32>
    %c0_12 = arith.constant 0 : index
    %c0_13 = arith.constant 0 : index
    %14 = vector.load %arg7[%c0_12, %c0_13] : memref<8x1xf32, #tpu.memory_space<vmem>>, vector<8x1xf32>
    tpu.vector_store %arg7[%c0_12, %c0_13], %13 {strides = array<i32>} : memref<8x1xf32, #tpu.memory_space<vmem>>, vector<8x1xf32>,
    %c0_14 = arith.constant 0 : index
    %c0_15 = arith.constant 0 : index
    %15 = vector.load %arg8[%c0_14, %c0_15] : memref<8x1xf32, #tpu.memory_space<vmem>>, vector<8x1xf32>
    %cst_16 = arith.constant 0.000000e+00 : f32
    %16 = vector.broadcast %cst_16 : f32 to vector<8x16xf32>
    %17 = arith.select %7, %4, %16 : vector<8x16xi1>, vector<8x16xf32>
    %cst_17 = arith.constant dense<0.000000e+00> : vector<8xf32>
    %18 = vector.multi_reduction <add>, %17, %cst_17 [1] : vector<8x16xf32> to vector<8xf32>
    %19 = vector.shape_cast %18 : vector<8xf32> to vector<8x1xf32>
    %20 = arith.addf %15, %19 : vector<8x1xf32>
    %c0_18 = arith.constant 0 : index
    %c0_19 = arith.constant 0 : index
    %21 = vector.load %arg8[%c0_18, %c0_19] : memref<8x1xf32, #tpu.memory_space<vmem>>, vector<8x1xf32>
    tpu.vector_store %arg8[%c0_18, %c0_19], %20 {strides = array<i32>} : memref<8x1xf32, #tpu.memory_space<vmem>>, vector<8x1xf32>,
    %c0_20 = arith.constant 0 : index
    %c0_21 = arith.constant 0 : index
    %22 = vector.load %arg9[%c0_20, %c0_21] : memref<8x1xf32, #tpu.memory_space<vmem>>, vector<8x1xf32>
    %cst_22 = arith.constant 0.000000e+00 : f32
    %23 = vector.broadcast %cst_22 : f32 to vector<8x16xf32>
    %24 = arith.select %7, %5, %23 : vector<8x16xi1>, vector<8x16xf32>
    %cst_23 = arith.constant dense<0.000000e+00> : vector<8xf32>
    %25 = vector.multi_reduction <add>, %24, %cst_23 [1] : vector<8x16xf32> to vector<8xf32>
    %26 = vector.shape_cast %25 : vector<8xf32> to vector<8x1xf32>
    %27 = arith.addf %22, %26 : vector<8x1xf32>
    %c0_24 = arith.constant 0 : index
    %c0_25 = arith.constant 0 : index
    %28 = vector.load %arg9[%c0_24, %c0_25] : memref<8x1xf32, #tpu.memory_space<vmem>>, vector<8x1xf32>
    tpu.vector_store %arg9[%c0_24, %c0_25], %27 {strides = array<i32>} : memref<8x1xf32, #tpu.memory_space<vmem>>, vector<8x1xf32>,
    %c0_26 = arith.constant 0 : index
    %c0_27 = arith.constant 0 : index
    %29 = vector.load %arg10[%c0_26, %c0_27] : memref<8x1xf32, #tpu.memory_space<vmem>>, vector<8x1xf32>
    %30 = arith.extui %7 : vector<8x16xi1> to vector<8x16xi32>
    %31 = arith.sitofp %30 : vector<8x16xi32> to vector<8x16xf32>
    %cst_28 = arith.constant dense<0.000000e+00> : vector<8xf32>
    %32 = vector.multi_reduction <add>, %31, %cst_28 [1] : vector<8x16xf32> to vector<8xf32>
    %33 = vector.shape_cast %32 : vector<8xf32> to vector<8x1xf32>
    %34 = arith.addf %29, %33 : vector<8x1xf32>
    %c0_29 = arith.constant 0 : index
    %c0_30 = arith.constant 0 : index
    %35 = vector.load %arg10[%c0_29, %c0_30] : memref<8x1xf32, #tpu.memory_space<vmem>>, vector<8x1xf32>
    tpu.vector_store %arg10[%c0_29, %c0_30], %34 {strides = array<i32>} : memref<8x1xf32, #tpu.memory_space<vmem>>, vector<8x1xf32>,
    %c0_i32_31 = arith.constant 0 : i32
    %36 = arith.cmpi eq, %arg1, %c0_i32_31 : i32
    %37 = arith.extui %36 : i1 to i32
    %c0_i32_32 = arith.constant 0 : i32
    %38 = arith.cmpi ne, %37, %c0_i32_32 : i32
    scf.if %38 {
      %39 = tpu.iota {dimensions = array<i32: 1>} : vector<8x128xi32>
      %c0_i32_33 = arith.constant 0 : i32
      %40 = vector.broadcast %c0_i32_33 : i32 to vector<8x128xi32>
      %41 = arith.cmpi eq, %39, %40 : vector<8x128xi32>
      %c0_34 = arith.constant 0 : index
      %c0_35 = arith.constant 0 : index
      %42 = vector.load %arg7[%c0_34, %c0_35] : memref<8x1xf32, #tpu.memory_space<vmem>>, vector<8x1xf32>
      %cst_36 = arith.constant 0.000000e+00 : f32
      %43 = vector.shape_cast %42 : vector<8x1xf32> to vector<8x1xf32>
      %44 = vector.broadcast %43 : vector<8x1xf32> to vector<8x128xf32>
      %45 = vector.broadcast %cst_36 : f32 to vector<8x128xf32>
      %46 = arith.select %41, %44, %45 : vector<8x128xi1>, vector<8x128xf32>
      %c1_i32 = arith.constant 1 : i32
      %47 = vector.broadcast %c1_i32 : i32 to vector<8x128xi32>
      %48 = arith.cmpi eq, %39, %47 : vector<8x128xi32>
      %c0_37 = arith.constant 0 : index
      %c0_38 = arith.constant 0 : index
      %49 = vector.load %arg8[%c0_37, %c0_38] : memref<8x1xf32, #tpu.memory_space<vmem>>, vector<8x1xf32>
      %50 = vector.shape_cast %49 : vector<8x1xf32> to vector<8x1xf32>
      %51 = vector.broadcast %50 : vector<8x1xf32> to vector<8x128xf32>
      %52 = arith.select %48, %51, %46 : vector<8x128xi1>, vector<8x128xf32>
      %c2_i32 = arith.constant 2 : i32
      %53 = vector.broadcast %c2_i32 : i32 to vector<8x128xi32>
      %54 = arith.cmpi eq, %39, %53 : vector<8x128xi32>
      %c0_39 = arith.constant 0 : index
      %c0_40 = arith.constant 0 : index
      %55 = vector.load %arg9[%c0_39, %c0_40] : memref<8x1xf32, #tpu.memory_space<vmem>>, vector<8x1xf32>
      %56 = vector.shape_cast %55 : vector<8x1xf32> to vector<8x1xf32>
      %57 = vector.broadcast %56 : vector<8x1xf32> to vector<8x128xf32>
      %58 = arith.select %54, %57, %52 : vector<8x128xi1>, vector<8x128xf32>
      %c3_i32 = arith.constant 3 : i32
      %59 = vector.broadcast %c3_i32 : i32 to vector<8x128xi32>
      %60 = arith.cmpi eq, %39, %59 : vector<8x128xi32>
      %c0_41 = arith.constant 0 : index
      %c0_42 = arith.constant 0 : index
      %61 = vector.load %arg10[%c0_41, %c0_42] : memref<8x1xf32, #tpu.memory_space<vmem>>, vector<8x1xf32>
      %62 = vector.shape_cast %61 : vector<8x1xf32> to vector<8x1xf32>
      %63 = vector.broadcast %62 : vector<8x1xf32> to vector<8x128xf32>
      %64 = arith.select %60, %63, %58 : vector<8x128xi1>, vector<8x128xf32>
      %65 = vector.shape_cast %64 : vector<8x128xf32> to vector<1x8x128xf32>
      %c0_43 = arith.constant 0 : index
      %c0_44 = arith.constant 0 : index
      %c0_45 = arith.constant 0 : index
      %66 = vector.load %arg6[%c0_43, %c0_44, %c0_45] : memref<1x8x128xf32, #tpu.memory_space<vmem>>, vector<1x8x128xf32>
      tpu.vector_store %arg6[%c0_43, %c0_44, %c0_45], %65 {strides = array<i32>} : memref<1x8x128xf32, #tpu.memory_space<vmem>>, vector<1x8x128xf32>,
    } else {
    }
    return
  }
  func.func @transform_0(%arg0: i32, %arg1: i32) -> (i32, i32) {
    %c1_i32 = arith.constant 1 : i32
    %0 = arith.muli %arg0, %c1_i32 : i32
    %1 = arith.addi %0, %arg1 : i32
    %c0_i32 = arith.constant 0 : i32
    %c0_i32_0 = arith.constant 0 : i32
    return %c0_i32, %1 : i32, i32
  }
  func.func @transform_1(%arg0: i32, %arg1: i32) -> (i32, i32) {
    %c1_i32 = arith.constant 1 : i32
    %0 = arith.muli %arg0, %c1_i32 : i32
    %1 = arith.addi %0, %arg1 : i32
    %c0_i32 = arith.constant 0 : i32
    %c0_i32_0 = arith.constant 0 : i32
    return %c0_i32, %1 : i32, i32
  }
  func.func @transform_2(%arg0: i32, %arg1: i32) -> (i32, i32) {
    %c1_i32 = arith.constant 1 : i32
    %0 = arith.muli %arg0, %c1_i32 : i32
    %1 = arith.addi %0, %arg1 : i32
    %c0_i32 = arith.constant 0 : i32
    %c0_i32_0 = arith.constant 0 : i32
    return %c0_i32, %1 : i32, i32
  }
  func.func @transform_3(%arg0: i32, %arg1: i32) -> (i32, i32) {
    %c1_i32 = arith.constant 1 : i32
    %0 = arith.muli %arg0, %c1_i32 : i32
    %1 = arith.addi %0, %arg1 : i32
    %c0_i32 = arith.constant 0 : i32
    %c0_i32_0 = arith.constant 0 : i32
    return %c0_i32, %1 : i32, i32
  }
  func.func @transform_4(%arg0: i32, %arg1: i32) -> (i32, i32, i32) {
    %c0_i32 = arith.constant 0 : i32
    %c0_i32_0 = arith.constant 0 : i32
    %c0_i32_1 = arith.constant 0 : i32
    return %arg0, %c0_i32, %c0_i32_0 : i32, i32, i32
  }
}

</mosaic_0001>

<llo_original>
// kernel: tpu_custom_call.1
$region0: #{tpu_custom_call.1}
  #allocation0 [shape = 'u32[]', space=smem, size = 0x4, offset = 0x4, fixed_abs, tag = 'smem constant byte address 0x4 - core index']
  #allocation1 [shape = 'u32[144,128]{1,0:T(1,128)}', space=vmem, size = 0x12000, scoped, tag = 'internal scratch']
  #allocation2 [shape = 'f32[8,1]{1,0:T(8,128)}', space=vmem, size = 0x1000, scoped, tag = 'scratch operand']
  #allocation3 [shape = 'f32[8,1]{1,0:T(8,128)}', space=vmem, size = 0x1000, scoped, tag = 'scratch operand']
  #allocation4 [shape = 'f32[8,1]{1,0:T(8,128)}', space=vmem, size = 0x1000, scoped, tag = 'scratch operand']
  #allocation5 [shape = 'f32[8,1]{1,0:T(8,128)}', space=vmem, size = 0x1000, scoped, tag = 'scratch operand']
  %s0 = inlined_call_operand.vmem [shape: f32[8,16], index: 0, kind: input, shape index: {}]
  %s1 = inlined_call_operand.hbm [shape: f32[8,16], index: 1, kind: input, shape index: {}]
  %s2 = inlined_call_operand.hbm [shape: f32[8,16], index: 2, kind: input, shape index: {}]
  %s3 = inlined_call_operand.vmem [shape: s32[8,16], index: 3, kind: input, shape index: {}]
  %s4 = inlined_call_operand.hbm [shape: f32[1,8,128], index: 4, kind: output, shape index: {}]
  %s5 = sld [smem:[#allocation0]]
  $region42: #{tpu_custom_call.1} parent=0
    _
  %s7 = ssub.s32 1, %s5
  %s8 = scalar_select 0, %s7, %s5
  $region1: #{tpu_custom_call.1} parent=0
    #allocation6 [shape = 'u8[4096]{0}', space=vmem, size = 0x1000, scoped, tag = 'input window, operand 1, single buffered']
    #allocation7 [shape = 's32[1]{0}', space=sflag, size = 0x4, scoped, tag = 'scoped memory for tpu_custom_call.1']
    #allocation8 [shape = 's32[1]{0}', space=sflag, size = 0x4, scoped, tag = 'scoped memory for tpu_custom_call.1']
    #allocation9 [shape = 'u8[4096]{0}', space=vmem, size = 0x1000, scoped, tag = 'input window, operand 2, single buffered']
    #allocation10 [shape = 's32[1]{0}', space=sflag, size = 0x4, scoped, tag = 'scoped memory for tpu_custom_call.1']
    #allocation11 [shape = 'u8[4096]{0}', space=vmem, size = 0x1000, scoped, tag = 'output window, operand 0, single buffered']
    %9 = vsyncpa [#allocation7], 0
    %10 = vsyncpa [#allocation10], 0
    %11 = vsyncpa [#allocation8], 0
    // Predicated region
    $region2: #{tpu_custom_call.1} parent=1 // pred_check
      _
    $region3: #{tpu_custom_call.1} parent=1 // pred_check_branch
      %13 = sbr.rel (0) target = $region5
    $region4: #{tpu_custom_call.1} parent=1 // pred_region
      %s14 = sadd.s32 0, 0
      %p15 = scmp.lt.s32.totalorder %s14, 0
      %s16 = scalar_select %p15, %s14, 0
      %s17 = smul.addr %s16, 8
      %s18 = scalar_lea.vmem %s0, %s17
      %s19 = sadd.s32 0, 0
    $region5: #{tpu_custom_call.1} parent=1 // pred_fallthru
      _
    // Predicated region
    $region6: #{tpu_custom_call.1} parent=1 // pred_check
      _
    $region7: #{tpu_custom_call.1} parent=1 // pred_check_branch
      %21 = sbr.rel (0) target = $region9
    $region8: #{tpu_custom_call.1} parent=1 // pred_region
      %s22 = sadd.s32 0, 0
      %s24 = ssub.s32 128, 128
      %25 = vsyncadd [#allocation7], %s24
      %s26 = smul.addr %s22, 128
      %s27 = scalar_lea.hbm %s1, %s26
      %s29 = sshll.u32 [#allocation6], 4
      %s30 = int_to_ptr.vmem [resolvable:$true] %s29
      %32 = dma.hbm_to_vmem [thread:$0]  %s27, 128, %s30, [#allocation7]
    $region9: #{tpu_custom_call.1} parent=1 // pred_fallthru
      _
    // Predicated region
    $region10: #{tpu_custom_call.1} parent=1 // pred_check
      _
    $region11: #{tpu_custom_call.1} parent=1 // pred_check_branch
      %34 = sbr.rel (0) target = $region13
    $region12: #{tpu_custom_call.1} parent=1 // pred_region
      %s35 = sadd.s32 0, 0
      %s37 = ssub.s32 128, 128
      %38 = vsyncadd [#allocation10], %s37
      %s39 = smul.addr %s35, 128
      %s40 = scalar_lea.hbm %s2, %s39
      %s42 = sshll.u32 [#allocation9], 4
      %s43 = int_to_ptr.vmem [resolvable:$true] %s42
      %45 = dma.hbm_to_vmem [thread:$0]  %s40, 128, %s43, [#allocation10]
    $region13: #{tpu_custom_call.1} parent=1 // pred_fallthru
      _
    // Predicated region
    $region14: #{tpu_custom_call.1} parent=1 // pred_check
      _
    $region15: #{tpu_custom_call.1} parent=1 // pred_check_branch
      %47 = sbr.rel (0) target = $region17
    $region16: #{tpu_custom_call.1} parent=1 // pred_region
      %s48 = sadd.s32 0, 0
      %p49 = scmp.lt.s32.totalorder %s48, 0
      %s50 = scalar_select %p49, %s48, 0
      %s51 = smul.addr %s50, 8
      %s52 = scalar_lea.vmem %s3, %s51
      %s53 = sadd.s32 0, 0
    $region17: #{tpu_custom_call.1} parent=1 // pred_fallthru
      _
    // Predicated region
    $region18: #{tpu_custom_call.1} parent=1 // pred_check
      _
    $region19: #{tpu_custom_call.1} parent=1 // pred_check_branch
      %55 = sbr.rel (0) target = $region21
    $region20: #{tpu_custom_call.1} parent=1 // pred_region
      %56 = dma.done [#allocation7], 128
    $region21: #{tpu_custom_call.1} parent=1 // pred_fallthru
      _
    // Predicated region
    $region22: #{tpu_custom_call.1} parent=1 // pred_check
      _
    $region23: #{tpu_custom_call.1} parent=1 // pred_check_branch
      %58 = sbr.rel (0) target = $region25
    $region24: #{tpu_custom_call.1} parent=1 // pred_region
      %59 = dma.done [#allocation10], 128
    $region25: #{tpu_custom_call.1} parent=1 // pred_fallthru
      _
    %s60 = sadd.s32 0, 0
    %p61 = scmp.lt.s32.totalorder %s60, 0
    %s62 = scalar_select %p61, %s60, 0
    %s63 = smul.addr %s62, 8
    %s64 = scalar_lea.vmem %s0, %s63
    %s65 = sadd.s32 0, 0
    %p66 = scmp.lt.s32.totalorder %s65, 0
    %s67 = scalar_select %p66, %s65, 0
    %s68 = smul.addr %s67, 8
    %s69 = scalar_lea.vmem %s3, %s68
    %s70 = sadd.s32 0, 0
    %p71 = scmp.lt.s32.totalorder %s70, 0
    %s72 = scalar_select %p71, %s70, 0
    %s73 = smul.addr %s72, 8
    %s74 = scalar_lea.vmem %s0, %s73
    %s75 = sadd.s32 0, 0
    %s76 = sadd.s32 0, 0
    %s77 = sadd.s32 0, 0
    %s78 = sadd.s32 0, 0
    %p79 = scmp.lt.s32.totalorder %s78, 0
    %s80 = scalar_select %p79, %s78, 0
    %s81 = smul.addr %s80, 8
    %s82 = scalar_lea.vmem %s3, %s81
    %s83 = sadd.s32 0, 0
    %p84 = scmp.eq.s32.totalorder 0, 0
    // Predicated region
    $region26: #{tpu_custom_call.1} parent=1 // pred_check
      %p85 = pneg %p84
    $region27: #{tpu_custom_call.1} parent=1 // pred_check_branch
      %87 = sbr.rel (%p85) target = $region29
    $region28: #{tpu_custom_call.1} parent=1 // pred_region
      %vm88 = vcmask 7168
      %89 = vst.msk [vmem:[#allocation2] sm:$0xff] %vm88, 0.0
      %90 = vst.msk [vmem:[#allocation3] sm:$0xff] %vm88, 0.0
      %91 = vst.msk [vmem:[#allocation4] sm:$0xff] %vm88, 0.0
      %92 = vst.msk [vmem:[#allocation5] sm:$0xff] %vm88, 0.0
    $region29: #{tpu_custom_call.1} parent=1 // pred_fallthru
      _
    %v93 = vld [vmem:[%s74] sm:$0xff]
    %v94 = vld [vmem:[#allocation6] sm:$0xff]
    %v95 = vld [vmem:[#allocation9] sm:$0xff]
    %v96 = vld [vmem:[%s82] sm:$0xff]
    %vm97 = vcmp.ne.s32.totalorder %v96, 0
    %v98 = vld [vmem:[#allocation2] sm:$0xff]
    %v99 = vsel %vm97, %v93, 0.0
    %vm100 = vcmask 130048
    %v101 = vsel %vm100, %v99, 0.0
    %102 = vadd.xlane.f32.xlu0 %v101
    %v103 = vpop.xlane.xlu0 %102
    %v104 = vadd.f32 %v98, %v103
    %vm105 = vcmask 7168
    %106 = vst.msk [vmem:[#allocation2] sm:$0xff] %vm105, %v104
    %v107 = vld [vmem:[#allocation3] sm:$0xff]
    %v108 = vsel %vm97, %v94, 0.0
    %v109 = vsel %vm100, %v108, 0.0
    %110 = vadd.xlane.f32.xlu0 %v109
    %v111 = vpop.xlane.xlu0 %110
    %v112 = vadd.f32 %v107, %v111
    %113 = vst.msk [vmem:[#allocation3] sm:$0xff] %vm105, %v112
    %v114 = vld [vmem:[#allocation4] sm:$0xff]
    %v115 = vsel %vm97, %v95, 0.0
    %v116 = vsel %vm100, %v115, 0.0
    %117 = vadd.xlane.f32.xlu0 %v116
    %v118 = vpop.xlane.xlu0 %117
    %v119 = vadd.f32 %v114, %v118
    %120 = vst.msk [vmem:[#allocation4] sm:$0xff] %vm105, %v119
    %v121 = vld [vmem:[#allocation5] sm:$0xff]
    %v122 = vsel %vm97, 1, 0
    %v123 = vcvt.s32.f32 %v122
    %v124 = vsel %vm100, %v123, 0.0
    %125 = vadd.xlane.f32.xlu0 %v124
    %v126 = vpop.xlane.xlu0 %125
    %v127 = vadd.f32 %v121, %v126
    %128 = vst.msk [vmem:[#allocation5] sm:$0xff] %vm105, %v127
    // Predicated region
    $region30: #{tpu_custom_call.1} parent=1 // pred_check
      %p129 = pneg %p84
    $region31: #{tpu_custom_call.1} parent=1 // pred_check_branch
      %131 = sbr.rel (%p129) target = $region33
    $region32: #{tpu_custom_call.1} parent=1 // pred_region
      %v132 = vlaneseq
      %v133 = vand.u32 %v132, 127
      %vm134 = vcmp.eq.s32.totalorder %v133, 0
      %v135 = vld [vmem:[#allocation2] sm:$0xff]
      %137 = vset.pattern.permute.xlu0 0
      %138 = vperm.xlu0 %137, %v135
      %v139 = vpop.permute.xlu0 %138
      %v141 = vsel %vm134, %v139, 0.0
      %vm142 = vcmp.eq.s32.totalorder %v133, 1
      %v143 = vld [vmem:[#allocation3] sm:$0xff]
      %145 = vset.pattern.permute.xlu0 0
      %146 = vperm.xlu0 %145, %v143
      %v147 = vpop.permute.xlu0 %146
      %v149 = vsel %vm142, %v147, %v141
      %vm150 = vcmp.eq.s32.totalorder %v133, 2
      %v151 = vld [vmem:[#allocation4] sm:$0xff]
      %153 = vset.pattern.permute.xlu0 0
      %154 = vperm.xlu0 %153, %v151
      %v155 = vpop.permute.xlu0 %154
      %v157 = vsel %vm150, %v155, %v149
      %vm158 = vcmp.eq.s32.totalorder %v133, 3
      %v159 = vld [vmem:[#allocation5] sm:$0xff]
      %161 = vset.pattern.permute.xlu0 0
      %162 = vperm.xlu0 %161, %v159
      %v163 = vpop.permute.xlu0 %162
      %v165 = vsel %vm158, %v163, %v157
      %166 = vst [vmem:[#allocation11] sm:$0xff] %v165
    $region33: #{tpu_custom_call.1} parent=1 // pred_fallthru
      _
    // Predicated region
    $region34: #{tpu_custom_call.1} parent=1 // pred_check
      _
    $region35: #{tpu_custom_call.1} parent=1 // pred_check_branch
      %168 = sbr.rel (0) target = $region37
    $region36: #{tpu_custom_call.1} parent=1 // pred_region
      %s170 = ssub.s32 128, 128
      %171 = vsyncadd [#allocation8], %s170
      %s173 = sshll.u32 [#allocation11], 4
      %s174 = int_to_ptr.vmem [resolvable:$true] %s173
      %176 = dma.vmem_to_hbm [thread:$0]  %s174, 128, %s4, [#allocation8]
    $region37: #{tpu_custom_call.1} parent=1 // pred_fallthru
      _
    // Predicated region
    $region38: #{tpu_custom_call.1} parent=1 // pred_check
      _
    $region39: #{tpu_custom_call.1} parent=1 // pred_check_branch
      %178 = sbr.rel (0) target = $region41
    $region40: #{tpu_custom_call.1} parent=1 // pred_region
      %179 = dma.done [#allocation8], 128
    $region41: #{tpu_custom_call.1} parent=1 // pred_fallthru
      _
    %180 = vsyncpa [#allocation7], 1
    %181 = vsyncpa [#allocation10], 1
    %182 = vsyncpa [#allocation8], 1

</llo_original>
